<compile_context>
chip_gen: v6e
topology: v6e:2x2x1
jax: 0.10.0
libtpu: 0.0.40
codegen_flags: <defaults>
</compile_context>

<pallas_src>
import jax
import jax.numpy as jnp
from jax.experimental import pallas as pl
from jax.experimental.pallas import tpu as pltpu


def fwd_dyn_kernel(obs_ref, act_ref,
                   wf_ref, ta_ref, b1_ref,
                   w2_ref, b2_ref,
                   w3_ref, b3_ref,
                   out_ref):
    obs_t = obs_ref[...]                                  # [O, TB] f32
    act = act_ref[...]                                    # [1, TB] i32
    a = ta_ref.shape[1]                                   # A
    tb = obs_t.shape[1]

    # one-hot(action)^T built directly in bf16 (exact 0/1): [A, TB]
    row = jax.lax.broadcasted_iota(jnp.int32, (a, tb), 0)
    one_hot_t = (row == act).astype(jnp.bfloat16)         # [A, TB] bf16

    # Layer 1 (embeddings pre-fused into the weights in prepare_params()):
    # h1^T = tanh(wfT @ obs^T + taT @ one_hot^T + b1'^T)
    pre1 = (jnp.dot(wf_ref[...], obs_t.astype(jnp.bfloat16),
                    preferred_element_type=jnp.float32)
            + jnp.dot(ta_ref[...], one_hot_t,
                      preferred_element_type=jnp.float32)
            + b1_ref[...])                                # [H, TB] f32
    h1 = jnp.tanh(pre1)                                   # f32 (EUP)

    # Layer 2: Linear(H, H) + tanh
    h2 = jnp.tanh(
        jnp.dot(w2_ref[...], h1.astype(jnp.bfloat16),
                preferred_element_type=jnp.float32)
        + b2_ref[...])                                    # [H, TB] f32

    # Output layer: Linear(H, O), output_gain = 1.0
    out_ref[...] = (
        jnp.dot(w3_ref[...], h2.astype(jnp.bfloat16),
                preferred_element_type=jnp.float32)
        + b3_ref[...])                                    # [O, TB] f32


def prepare_params(params):
    """One-time (per weight update) fusion + transposition + bf16 casts.
    Keep this OUT of the per-step hot path (hoisted per perf review)."""
    wf = params["w_obs"] @ params["w1a"]                  # [O, H]
    ta = params["emb"] @ params["w1b"]                    # [A, H]
    b1p = params["b1"] + params["b_obs"] @ params["w1a"]  # [1, H]
    return {
        "wft": wf.T.astype(jnp.bfloat16),                          # [H, O]
        "tat": ta.T.astype(jnp.bfloat16),                          # [H, A]
        "b1t": b1p.reshape(-1, 1).astype(jnp.float32),             # [H, 1]
        "w2t": params["w2"].T.astype(jnp.bfloat16),                # [H, H]
        "b2t": params["b2"].reshape(-1, 1).astype(jnp.float32),    # [H, 1]
        "w3t": params["w3"].T.astype(jnp.bfloat16),                # [O, H]
        "b3t": params["b3"].reshape(-1, 1).astype(jnp.float32),    # [O, 1]
    }


def _round_up(x, m):
    return ((x + m - 1) // m) * m


def _choose_tb(B, block_b):
    """Pick a lane-dense batch tile.

    Small batches: one step with the full batch as the block.
    Large batches: 128-multiple tiles capped at block_b, and at least two
    grid steps so v7x's two TensorCores both get work."""
    if B <= 256:
        return B
    half = _round_up((B + 1) // 2, 128)   # >= 2 steps when B is large
    return max(128, min((block_b // 128) * 128, half))


def forward_dynamics(observation, action_idx, prepped, *, block_b=4096):
    """observation: [B, O] f32, action_idx: [B] int (Categorical).
    `prepped` = prepare_params(params)."""
    B, O = observation.shape
    H = prepped["w2t"].shape[0]
    A = prepped["tat"].shape[1]

    # Transposed, lane-dense inputs: batch on the 128-lane axis.
    obs_t = observation.astype(jnp.float32).T             # [O, B]
    act = action_idx.reshape(1, B).astype(jnp.int32)      # [1, B]

    tb = _choose_tb(B, block_b)
    grid = (pl.cdiv(B, tb),)

    flops = 2 * B * (O * H + A * H + H * H + H * O)
    transcendentals = 2 * B * H
    bytes_accessed = (obs_t.size * 4 + act.size * 4
                      + (prepped["wft"].size + prepped["tat"].size
                         + prepped["w2t"].size + prepped["w3t"].size) * 2
                      + (prepped["b1t"].size + prepped["b2t"].size
                         + prepped["b3t"].size) * 4
                      + B * O * 4)

    out_t = pl.pallas_call(
        fwd_dyn_kernel,
        out_shape=jax.ShapeDtypeStruct((O, B), jnp.float32),
        grid=grid,
        in_specs=[
            pl.BlockSpec((O, tb), lambda i: (0, i)),   # obs^T (batch-blocked)
            pl.BlockSpec((1, tb), lambda i: (0, i)),   # action idx (batch-blocked)
            pl.BlockSpec((H, O), lambda i: (0, 0)),    # fused obs->h1 weight^T
            pl.BlockSpec((H, A), lambda i: (0, 0)),    # fused action table^T
            pl.BlockSpec((H, 1), lambda i: (0, 0)),    # fused bias 1
            pl.BlockSpec((H, H), lambda i: (0, 0)),    # w2^T
            pl.BlockSpec((H, 1), lambda i: (0, 0)),    # b2
            pl.BlockSpec((O, H), lambda i: (0, 0)),    # w3^T
            pl.BlockSpec((O, 1), lambda i: (0, 0)),    # b3
        ],
        out_specs=pl.BlockSpec((O, tb), lambda i: (0, i)),
        compiler_params=pltpu.CompilerParams(
            dimension_semantics=("parallel",)),
        cost_estimate=pl.CostEstimate(flops=flops,
                                      transcendentals=transcendentals,
                                      bytes_accessed=bytes_accessed),
    )(obs_t, act,
      prepped["wft"], prepped["tat"], prepped["b1t"],
      prepped["w2t"], prepped["b2t"],
      prepped["w3t"], prepped["b3t"])

    return out_t.T                                          # [B, O]


def init_params(key, observation_size, hidden_size, action_size):
    """Deterministic synthetic init (PyTorch-Linear-style uniform bounds).
    Weights stored as [in_features, out_features]; layer-1 weight of the
    Linear(2H, H) kept pre-split as w1a (obs half) / w1b (action half)."""
    O, H, A = observation_size, hidden_size, action_size
    ks = jax.random.split(key, 10)

    def u(k, shape, fan_in):
        bound = 1.0 / (fan_in ** 0.5)
        return jax.random.uniform(k, shape, jnp.float32, -bound, bound)

    return {
        # observation_embedding: Linear(O, H)
        "w_obs": u(ks[0], (O, H), O),
        "b_obs": u(ks[1], (1, H), O),
        # action_embedding: Embedding(A, H)
        "emb": jax.random.normal(ks[2], (A, H), jnp.float32),
        # MLP layer 1: Linear(2H, H), split along input dim
        "w1a": u(ks[3], (H, H), 2 * H),
        "w1b": u(ks[4], (H, H), 2 * H),
        "b1": u(ks[5], (1, H), 2 * H),
        # MLP layer 2: Linear(H, H)
        "w2": u(ks[6], (H, H), H),
        "b2": u(ks[7], (1, H), H),
        # MLP output: Linear(H, O), output_gain = 1.0
        "w3": u(ks[8], (H, O), H),
        "b3": u(ks[9], (1, O), H),
    }


def reference_forward(observation, action_idx, params):
    """Pure-JAX f32 reference with the original (unfused) module semantics."""
    obs_emb = observation @ params["w_obs"] + params["b_obs"]
    act_emb = params["emb"][action_idx]
    h1 = jnp.tanh(obs_emb @ params["w1a"] + act_emb @ params["w1b"]
                  + params["b1"])
    h2 = jnp.tanh(h1 @ params["w2"] + params["b2"])
    return h2 @ params["w3"] + params["b3"]


if __name__ == "__main__":
    B, O, H, A = 8, 16, 32, 6   # batch, observation_size, hidden_size, action_size

    key = jax.random.PRNGKey(0)
    k_obs, k_act, k_par, k_obs2, k_act2 = jax.random.split(key, 5)

    params = init_params(k_par, O, H, A)
    prepped = prepare_params(params)        # hoisted one-time weight fusion

    # --- small test: single grid step (block = whole batch) ----------------
    observation = jax.random.normal(k_obs, (B, O), jnp.float32)
    action_idx = jax.random.randint(k_act, (B,), 0, A, jnp.int32)

    out = jax.block_until_ready(forward_dynamics(observation, action_idx, prepped))
    ref = reference_forward(observation, action_idx, params)
    assert out.shape == (B, O)
    assert jnp.allclose(out, ref, atol=5e-2, rtol=5e-2), "mismatch vs reference (small)"

    # --- larger batch: exercises the lane-dense batch grid (>=2 steps) -----
    B2 = 512
    observation2 = jax.random.normal(k_obs2, (B2, O), jnp.float32)
    action_idx2 = jax.random.randint(k_act2, (B2,), 0, A, jnp.int32)

    out2 = jax.block_until_ready(
        forward_dynamics(observation2, action_idx2, prepped, block_b=256))
    ref2 = reference_forward(observation2, action_idx2, params)
    assert out2.shape == (B2, O)
    assert jnp.allclose(out2, ref2, atol=5e-2, rtol=5e-2), "mismatch vs reference (grid)"

    print("KERNEL_OK")
</pallas_src>

<mosaic_0001>
module attributes {stable_mosaic.version = 11 : i64} {
  func.func @fwd_dyn_kernel(%arg0: i32, %arg1: memref<16x8xf32, #tpu.memory_space<vmem>>, %arg2: memref<1x8xi32, #tpu.memory_space<vmem>>, %arg3: memref<32x16xbf16, #tpu.memory_space<vmem>>, %arg4: memref<32x6xbf16, #tpu.memory_space<vmem>>, %arg5: memref<32x1xf32, #tpu.memory_space<vmem>>, %arg6: memref<32x32xbf16, #tpu.memory_space<vmem>>, %arg7: memref<32x1xf32, #tpu.memory_space<vmem>>, %arg8: memref<16x32xbf16, #tpu.memory_space<vmem>>, %arg9: memref<16x1xf32, #tpu.memory_space<vmem>>, %arg10: memref<16x8xf32, #tpu.memory_space<vmem>>) attributes {dimension_semantics = [#tpu.dimension_semantics<parallel>], iteration_bounds = array<i64: 1>, scalar_prefetch = 0 : i64, scratch_operands = 0 : i64, tpu.core_type = #tpu.core_type<tc>, window_params = [{transform_indices = @transform_0, window_bounds = array<i64: 16, 8>}, {transform_indices = @transform_1, window_bounds = array<i64: 1, 8>}, {pipeline_mode = #tpu.pipeline_mode<synchronous>, transform_indices = @transform_2, window_bounds = array<i64: 32, 16>}, {pipeline_mode = #tpu.pipeline_mode<synchronous>, transform_indices = @transform_3, window_bounds = array<i64: 32, 6>}, {pipeline_mode = #tpu.pipeline_mode<synchronous>, transform_indices = @transform_4, window_bounds = array<i64: 32, 1>}, {pipeline_mode = #tpu.pipeline_mode<synchronous>, transform_indices = @transform_5, window_bounds = array<i64: 32, 32>}, {pipeline_mode = #tpu.pipeline_mode<synchronous>, transform_indices = @transform_6, window_bounds = array<i64: 32, 1>}, {pipeline_mode = #tpu.pipeline_mode<synchronous>, transform_indices = @transform_7, window_bounds = array<i64: 16, 32>}, {pipeline_mode = #tpu.pipeline_mode<synchronous>, transform_indices = @transform_8, window_bounds = array<i64: 16, 1>}, {transform_indices = @transform_9, window_bounds = array<i64: 16, 8>}]} {
    %c0 = arith.constant 0 : index
    %c0_0 = arith.constant 0 : index
    %0 = vector.load %arg1[%c0, %c0_0] : memref<16x8xf32, #tpu.memory_space<vmem>>, vector<16x8xf32>
    %c0_1 = arith.constant 0 : index
    %c0_2 = arith.constant 0 : index
    %1 = vector.load %arg2[%c0_1, %c0_2] : memref<1x8xi32, #tpu.memory_space<vmem>>, vector<1x8xi32>
    %2 = tpu.iota {dimensions = array<i32: 0>} : vector<6x8xi32>
    %3 = vector.broadcast %1 : vector<1x8xi32> to vector<6x8xi32>
    %4 = arith.cmpi eq, %2, %3 : vector<6x8xi32>
    %5 = arith.extui %4 : vector<6x8xi1> to vector<6x8xi32>
    %6 = arith.sitofp %5 : vector<6x8xi32> to vector<6x8xf32>
    %7 = arith.truncf %6 : vector<6x8xf32> to vector<6x8xbf16>
    %c0_3 = arith.constant 0 : index
    %c0_4 = arith.constant 0 : index
    %8 = vector.load %arg3[%c0_3, %c0_4] : memref<32x16xbf16, #tpu.memory_space<vmem>>, vector<32x16xbf16>
    %9 = arith.truncf %0 : vector<16x8xf32> to vector<16x8xbf16>
    %cst = arith.constant dense<0.000000e+00> : vector<32x8xf32>
    %10 = tpu.matmul %8, %9, %cst {dimension_numbers = #tpu.dot_dimension_numbers<[1], [0], [0], [1], [0, 0, 1, 1], [], []>} : vector<32x16xbf16>, vector<16x8xbf16>, vector<32x8xf32> -> vector<32x8xf32>
    %c0_5 = arith.constant 0 : index
    %c0_6 = arith.constant 0 : index
    %11 = vector.load %arg4[%c0_5, %c0_6] : memref<32x6xbf16, #tpu.memory_space<vmem>>, vector<32x6xbf16>
    %cst_7 = arith.constant dense<0.000000e+00> : vector<32x8xf32>
    %12 = tpu.matmul %11, %7, %cst_7 {dimension_numbers = #tpu.dot_dimension_numbers<[1], [0], [0], [1], [0, 0, 1, 1], [], []>} : vector<32x6xbf16>, vector<6x8xbf16>, vector<32x8xf32> -> vector<32x8xf32>
    %13 = arith.addf %10, %12 : vector<32x8xf32>
    %c0_8 = arith.constant 0 : index
    %c0_9 = arith.constant 0 : index
    %14 = vector.load %arg5[%c0_8, %c0_9] : memref<32x1xf32, #tpu.memory_space<vmem>>, vector<32x1xf32>
    %15 = vector.broadcast %14 : vector<32x1xf32> to vector<32x8xf32>
    %16 = arith.addf %13, %15 : vector<32x8xf32>
    %17 = math.tanh %16 : vector<32x8xf32>
    %c0_10 = arith.constant 0 : index
    %c0_11 = arith.constant 0 : index
    %18 = vector.load %arg6[%c0_10, %c0_11] : memref<32x32xbf16, #tpu.memory_space<vmem>>, vector<32x32xbf16>
    %19 = arith.truncf %17 : vector<32x8xf32> to vector<32x8xbf16>
    %cst_12 = arith.constant dense<0.000000e+00> : vector<32x8xf32>
    %20 = tpu.matmul %18, %19, %cst_12 {dimension_numbers = #tpu.dot_dimension_numbers<[1], [0], [0], [1], [0, 0, 1, 1], [], []>} : vector<32x32xbf16>, vector<32x8xbf16>, vector<32x8xf32> -> vector<32x8xf32>
    %c0_13 = arith.constant 0 : index
    %c0_14 = arith.constant 0 : index
    %21 = vector.load %arg7[%c0_13, %c0_14] : memref<32x1xf32, #tpu.memory_space<vmem>>, vector<32x1xf32>
    %22 = vector.broadcast %21 : vector<32x1xf32> to vector<32x8xf32>
    %23 = arith.addf %20, %22 : vector<32x8xf32>
    %24 = math.tanh %23 : vector<32x8xf32>
    %c0_15 = arith.constant 0 : index
    %c0_16 = arith.constant 0 : index
    %25 = vector.load %arg8[%c0_15, %c0_16] : memref<16x32xbf16, #tpu.memory_space<vmem>>, vector<16x32xbf16>
    %26 = arith.truncf %24 : vector<32x8xf32> to vector<32x8xbf16>
    %cst_17 = arith.constant dense<0.000000e+00> : vector<16x8xf32>
    %27 = tpu.matmul %25, %26, %cst_17 {dimension_numbers = #tpu.dot_dimension_numbers<[1], [0], [0], [1], [0, 0, 1, 1], [], []>} : vector<16x32xbf16>, vector<32x8xbf16>, vector<16x8xf32> -> vector<16x8xf32>
    %c0_18 = arith.constant 0 : index
    %c0_19 = arith.constant 0 : index
    %28 = vector.load %arg9[%c0_18, %c0_19] : memref<16x1xf32, #tpu.memory_space<vmem>>, vector<16x1xf32>
    %29 = vector.broadcast %28 : vector<16x1xf32> to vector<16x8xf32>
    %30 = arith.addf %27, %29 : vector<16x8xf32>
    %c0_20 = arith.constant 0 : index
    %c0_21 = arith.constant 0 : index
    %31 = vector.load %arg10[%c0_20, %c0_21] : memref<16x8xf32, #tpu.memory_space<vmem>>, vector<16x8xf32>
    tpu.vector_store %arg10[%c0_20, %c0_21], %30 {strides = array<i32>} : memref<16x8xf32, #tpu.memory_space<vmem>>, vector<16x8xf32>,
    return
  }
  func.func @transform_0(%arg0: i32) -> (i32, i32) {
    %c0_i32 = arith.constant 0 : i32
    %c0_i32_0 = arith.constant 0 : i32
    return %c0_i32, %arg0 : i32, i32
  }
  func.func @transform_1(%arg0: i32) -> (i32, i32) {
    %c0_i32 = arith.constant 0 : i32
    %c0_i32_0 = arith.constant 0 : i32
    return %c0_i32, %arg0 : i32, i32
  }
  func.func @transform_2(%arg0: i32) -> (i32, i32) {
    %c0_i32 = arith.constant 0 : i32
    %c0_i32_0 = arith.constant 0 : i32
    %c0_i32_1 = arith.constant 0 : i32
    return %c0_i32, %c0_i32_0 : i32, i32
  }
  func.func @transform_3(%arg0: i32) -> (i32, i32) {
    %c0_i32 = arith.constant 0 : i32
    %c0_i32_0 = arith.constant 0 : i32
    %c0_i32_1 = arith.constant 0 : i32
    return %c0_i32, %c0_i32_0 : i32, i32
  }
  func.func @transform_4(%arg0: i32) -> (i32, i32) {
    %c0_i32 = arith.constant 0 : i32
    %c0_i32_0 = arith.constant 0 : i32
    %c0_i32_1 = arith.constant 0 : i32
    return %c0_i32, %c0_i32_0 : i32, i32
  }
  func.func @transform_5(%arg0: i32) -> (i32, i32) {
    %c0_i32 = arith.constant 0 : i32
    %c0_i32_0 = arith.constant 0 : i32
    %c0_i32_1 = arith.constant 0 : i32
    return %c0_i32, %c0_i32_0 : i32, i32
  }
  func.func @transform_6(%arg0: i32) -> (i32, i32) {
    %c0_i32 = arith.constant 0 : i32
    %c0_i32_0 = arith.constant 0 : i32
    %c0_i32_1 = arith.constant 0 : i32
    return %c0_i32, %c0_i32_0 : i32, i32
  }
  func.func @transform_7(%arg0: i32) -> (i32, i32) {
    %c0_i32 = arith.constant 0 : i32
    %c0_i32_0 = arith.constant 0 : i32
    %c0_i32_1 = arith.constant 0 : i32
    return %c0_i32, %c0_i32_0 : i32, i32
  }
  func.func @transform_8(%arg0: i32) -> (i32, i32) {
    %c0_i32 = arith.constant 0 : i32
    %c0_i32_0 = arith.constant 0 : i32
    %c0_i32_1 = arith.constant 0 : i32
    return %c0_i32, %c0_i32_0 : i32, i32
  }
  func.func @transform_9(%arg0: i32) -> (i32, i32) {
    %c0_i32 = arith.constant 0 : i32
    %c0_i32_0 = arith.constant 0 : i32
    return %c0_i32, %arg0 : i32, i32
  }
}

</mosaic_0001>

<llo_original>
// kernel: tpu_custom_call.1
$region0: #{tpu_custom_call.1}
  #allocation0 [shape = 'u32[]', space=smem, size = 0x4, offset = 0x4, fixed_abs, tag = 'smem constant byte address 0x4 - core index']
  #allocation1 [shape = 'u32[144,128]{1,0:T(1,128)}', space=vmem, size = 0x12000, scoped, tag = 'internal scratch']
  %s0 = inlined_call_operand.vmem [shape: f32[16,8], index: 0, kind: input, shape index: {}]
  %s1 = inlined_call_operand.vmem [shape: s32[1,8], index: 1, kind: input, shape index: {}]
  %s2 = inlined_call_operand.vmem [shape: bf16[32,16], index: 2, kind: input, shape index: {}]
  %s3 = inlined_call_operand.vmem [shape: bf16[32,6], index: 3, kind: input, shape index: {}]
  %s4 = inlined_call_operand.vmem [shape: f32[32,1], index: 4, kind: input, shape index: {}]
  %s5 = inlined_call_operand.vmem [shape: bf16[32,32], index: 5, kind: input, shape index: {}]
  %s6 = inlined_call_operand.vmem [shape: f32[32,1], index: 6, kind: input, shape index: {}]
  %s7 = inlined_call_operand.vmem [shape: bf16[16,32], index: 7, kind: input, shape index: {}]
  %s8 = inlined_call_operand.vmem [shape: f32[16,1], index: 8, kind: input, shape index: {}]
  %s9 = inlined_call_operand.vmem [shape: f32[16,8], index: 9, kind: output, shape index: {}]
  %s10 = sld [smem:[#allocation0]]
  $region46: #{tpu_custom_call.1} parent=0
    _
  %s12 = ssub.s32 1, %s10
  %s13 = scalar_select 0, %s12, %s10
  // Predicated region
  $region2: #{tpu_custom_call.1} parent=0 // pred_check
    _
  $region3: #{tpu_custom_call.1} parent=0 // pred_check_branch
    %15 = sbr.rel (0) target = $region5
  $region4: #{tpu_custom_call.1} parent=0 // pred_region
    _
  $region5: #{tpu_custom_call.1} parent=0 // pred_fallthru
    _
  // Predicated region
  $region6: #{tpu_custom_call.1} parent=0 // pred_check
    _
  $region7: #{tpu_custom_call.1} parent=0 // pred_check_branch
    %17 = sbr.rel (0) target = $region9
  $region8: #{tpu_custom_call.1} parent=0 // pred_region
    _
  $region9: #{tpu_custom_call.1} parent=0 // pred_fallthru
    _
  // Predicated region
  $region10: #{tpu_custom_call.1} parent=0 // pred_check
    _
  $region11: #{tpu_custom_call.1} parent=0 // pred_check_branch
    %19 = sbr.rel (0) target = $region13
  $region12: #{tpu_custom_call.1} parent=0 // pred_region
    _
  $region13: #{tpu_custom_call.1} parent=0 // pred_fallthru
    _
  // Predicated region
  $region14: #{tpu_custom_call.1} parent=0 // pred_check
    _
  $region15: #{tpu_custom_call.1} parent=0 // pred_check_branch
    %21 = sbr.rel (0) target = $region17
  $region16: #{tpu_custom_call.1} parent=0 // pred_region
    _
  $region17: #{tpu_custom_call.1} parent=0 // pred_fallthru
    _
  // Predicated region
  $region18: #{tpu_custom_call.1} parent=0 // pred_check
    _
  $region19: #{tpu_custom_call.1} parent=0 // pred_check_branch
    %23 = sbr.rel (0) target = $region21
  $region20: #{tpu_custom_call.1} parent=0 // pred_region
    _
  $region21: #{tpu_custom_call.1} parent=0 // pred_fallthru
    _
  // Predicated region
  $region22: #{tpu_custom_call.1} parent=0 // pred_check
    _
  $region23: #{tpu_custom_call.1} parent=0 // pred_check_branch
    %25 = sbr.rel (0) target = $region25
  $region24: #{tpu_custom_call.1} parent=0 // pred_region
    _
  $region25: #{tpu_custom_call.1} parent=0 // pred_fallthru
    _
  // Predicated region
  $region26: #{tpu_custom_call.1} parent=0 // pred_check
    _
  $region27: #{tpu_custom_call.1} parent=0 // pred_check_branch
    %27 = sbr.rel (0) target = $region29
  $region28: #{tpu_custom_call.1} parent=0 // pred_region
    _
  $region29: #{tpu_custom_call.1} parent=0 // pred_fallthru
    _
  // Predicated region
  $region30: #{tpu_custom_call.1} parent=0 // pred_check
    _
  $region31: #{tpu_custom_call.1} parent=0 // pred_check_branch
    %29 = sbr.rel (0) target = $region33
  $region32: #{tpu_custom_call.1} parent=0 // pred_region
    _
  $region33: #{tpu_custom_call.1} parent=0 // pred_fallthru
    _
  // Predicated region
  $region34: #{tpu_custom_call.1} parent=0 // pred_check
    _
  $region35: #{tpu_custom_call.1} parent=0 // pred_check_branch
    %31 = sbr.rel (0) target = $region37
  $region36: #{tpu_custom_call.1} parent=0 // pred_region
    _
  $region37: #{tpu_custom_call.1} parent=0 // pred_fallthru
    _
  %v33 = vld [vmem:[%s0] sm:$0xff]
  %v34 = vld [vmem:[%s0 + $0x8] sm:$0xff]
  %v35 = vld [vmem:[%s1] sm:$0x1]
  %v36 = vlaneseq
  %v37 = vshrl.u32 %v36, 7
  %v38 = vlaneseq
  %v39 = vshrl.u32 %v38, 7
  %v40 = vsub.s32 0, %v39
  %v41 = vrot.slane %v35, %v40
  %vm42 = vcmp.eq.s32.totalorder %v37, %v41
  %v43 = vsel %vm42, 1, 0
  %v44 = vcvt.s32.f32 %v43
  %v45 = vpack.c.bf16 %v44, %v44
  %v46 = vld [vmem:[%s2] sm:$0xf]
  %v47 = vld [vmem:[%s2 + $0x4] sm:$0xf]
  %v48 = vld [vmem:[%s2 + $0x8] sm:$0xf]
  %v49 = vld [vmem:[%s2 + $0xc] sm:$0xf]
  %v50 = vpack.c.bf16 %v34, %v33
  %v51 = vld [vmem:[%s3] sm:$0xf]
  %v52 = vld [vmem:[%s3 + $0x4] sm:$0xf]
  %v53 = vld [vmem:[%s3 + $0x8] sm:$0xf]
  %v54 = vld [vmem:[%s3 + $0xc] sm:$0xf]
  %v59 = vunpack.c.l.b16 %v51
  %v60 = vunpack.c.l.b16 %v52
  %v61 = vunpack.c.l.b16 %v53
  %v62 = vunpack.c.l.b16 %v54
  %v63 = vpack.c.b16 %v60, %v59
  %v64 = vpack.c.b16 %v62, %v61
  %vm65 = vcmask 48128
  %v67 = vsel %vm65, %v63, 0
  %v70 = vsel %vm65, %v64, 0
  %vm72 = vcmask 1042432
  %v74 = vsel %vm72, %v45, 0
  %76 = vmatprep.subr.bf16.mxu0 0
  %77 = vmatpush1.bf16.msra.mxu0 0
  %78 = vmatprep.subr.bf16.mxu0 0
  %79 = vmatpush1.bf16.msra.mxu0 0
  %80 = vmatprep.subr.bf16.mxu0 0
  %81 = vmatpush1.bf16.msra.mxu0 0
  %82 = vmatprep.subr.bf16.mxu0 0
  %83 = vmatpush1.bf16.msra.mxu0 0
  %84 = vmatprep.subr.bf16.mxu0 0
  %85 = vmatpush1.bf16.msra.mxu0 0
  %86 = vmatprep.subr.bf16.mxu0 0
  %87 = vmatpush1.bf16.msra.mxu0 0
  %88 = vmatprep.subr.bf16.mxu0 0
  %89 = vmatpush1.bf16.msra.mxu0 0
  %90 = vmatprep.subr.bf16.mxu0 0
  %91 = vmatpush1.bf16.msra.mxu0 %v74
  %92 = vmatprep.subr.bf16.mxu0 0
  %93 = vmatpush2.bf16.msra.mxu0 0
  %94 = vmatprep.subr.bf16.mxu0 0
  %95 = vmatpush2.bf16.msra.mxu0 0
  %96 = vmatprep.subr.bf16.mxu0 0
  %97 = vmatpush2.bf16.msra.mxu0 0
  %98 = vmatprep.subr.bf16.mxu0 0
  %99 = vmatpush2.bf16.msra.mxu0 0
  %100 = vmatprep.subr.bf16.mxu0 0
  %101 = vmatpush2.bf16.msra.mxu0 0
  %102 = vmatprep.subr.bf16.mxu0 0
  %103 = vmatpush2.bf16.msra.mxu0 0
  %104 = vmatprep.subr.bf16.mxu0 0
  %105 = vmatpush2.bf16.msra.mxu0 0
  %106 = vmatprep.subr.bf16.mxu0 0
  %107 = vmatpush2.bf16.msra.mxu0 0
  %108 = vmatprep.mubr.bf16.mxu0 0
  %109 = vmatmul.mubr.bf16.gmra.mxu0 %v67
  %v110 = vpop.f32.mrf.mxu0
  %v111 = vadd.f32 0.0, %v110
  %v112 = vpop.f32.mrf.mxu0
  %v113 = vpop.f32.mrf.mxu0
  %v114 = vadd.f32 0.0, %v113
  %v115 = vpop.f32.mrf.mxu0
  %116 = vmatprep.mubr.bf16.mxu0 0
  %117 = vmatmul.mubr.bf16.gmra.mxu0 %v70
  %v118 = vpop.f32.mrf.mxu0
  %v119 = vadd.f32 0.0, %v118
  %v120 = vpop.f32.mrf.mxu0
  %v121 = vpop.f32.mrf.mxu0
  %v122 = vadd.f32 0.0, %v121
  %v123 = vpop.f32.mrf.mxu0
  %124 = vdwg.mxu0
  %v129 = vunpack.c.l.b16 %v46
  %v130 = vunpack.c.l.b16 %v47
  %v131 = vunpack.c.l.b16 %v48
  %v132 = vunpack.c.l.b16 %v49
  %v133 = vpack.c.b16 %v130, %v129
  %v134 = vpack.c.b16 %v132, %v131
  %vm135 = vcmask 130048
  %v137 = vsel %vm135, %v133, 0
  %v140 = vsel %vm135, %v134, 0
  %142 = vmatprep.subr.bf16.mxu0 0
  %143 = vmatpush1.bf16.msra.mxu0 0
  %144 = vmatprep.subr.bf16.mxu0 0
  %145 = vmatpush1.bf16.msra.mxu0 0
  %146 = vmatprep.subr.bf16.mxu0 0
  %147 = vmatpush1.bf16.msra.mxu0 0
  %148 = vmatprep.subr.bf16.mxu0 0
  %149 = vmatpush1.bf16.msra.mxu0 0
  %150 = vmatprep.subr.bf16.mxu0 0
  %151 = vmatpush1.bf16.msra.mxu0 0
  %152 = vmatprep.subr.bf16.mxu0 0
  %153 = vmatpush1.bf16.msra.mxu0 0
  %154 = vmatprep.subr.bf16.mxu0 0
  %155 = vmatpush1.bf16.msra.mxu0 0
  %156 = vmatprep.subr.bf16.mxu0 0
  %157 = vmatpush1.bf16.msra.mxu0 %v50
  %158 = vmatprep.subr.bf16.mxu0 0
  %159 = vmatpush2.bf16.msra.mxu0 0
  %160 = vmatprep.subr.bf16.mxu0 0
  %161 = vmatpush2.bf16.msra.mxu0 0
  %162 = vmatprep.subr.bf16.mxu0 0
  %163 = vmatpush2.bf16.msra.mxu0 0
  %164 = vmatprep.subr.bf16.mxu0 0
  %165 = vmatpush2.bf16.msra.mxu0 0
  %166 = vmatprep.subr.bf16.mxu0 0
  %167 = vmatpush2.bf16.msra.mxu0 0
  %168 = vmatprep.subr.bf16.mxu0 0
  %169 = vmatpush2.bf16.msra.mxu0 0
  %170 = vmatprep.subr.bf16.mxu0 0
  %171 = vmatpush2.bf16.msra.mxu0 0
  %172 = vmatprep.subr.bf16.mxu0 0
  %173 = vmatpush2.bf16.msra.mxu0 0
  %174 = vmatprep.mubr.bf16.mxu0 0
  %175 = vmatmul.mubr.bf16.gmra.mxu0 %v137
  %v176 = vpop.f32.mrf.mxu0
  %v177 = vadd.f32 %v111, %v176
  %v178 = vpop.f32.mrf.mxu0
  %v179 = vpop.f32.mrf.mxu0
  %v180 = vadd.f32 %v114, %v179
  %v181 = vpop.f32.mrf.mxu0
  %182 = vmatprep.mubr.bf16.mxu0 0
  %183 = vmatmul.mubr.bf16.gmra.mxu0 %v140
  %v184 = vpop.f32.mrf.mxu0
  %v185 = vadd.f32 %v119, %v184
  %v186 = vpop.f32.mrf.mxu0
  %v187 = vpop.f32.mrf.mxu0
  %v188 = vadd.f32 %v122, %v187
  %v189 = vpop.f32.mrf.mxu0
  %190 = vdwg.mxu0
  %v191 = vld [vmem:[%s4] sm:$0xff]
  %v192 = vld [vmem:[%s4 + $0x8] sm:$0xff]
  %v193 = vld [vmem:[%s4 + $0x10] sm:$0xff]
  %v194 = vld [vmem:[%s4 + $0x18] sm:$0xff]
  %196 = vset.pattern.permute.xlu0 0
  %197 = vperm.xlu0 %196, %v191
  %v198 = vpop.permute.xlu0 %197
  %201 = vset.pattern.permute.xlu0 0
  %202 = vperm.xlu0 %201, %v192
  %v203 = vpop.permute.xlu0 %202
  %206 = vset.pattern.permute.xlu0 0
  %207 = vperm.xlu0 %206, %v193
  %v208 = vpop.permute.xlu0 %207
  %211 = vset.pattern.permute.xlu0 0
  %212 = vperm.xlu0 %211, %v194
  %v213 = vpop.permute.xlu0 %212
  %v215 = vadd.f32 %v177, %v198
  %v216 = vadd.f32 %v180, %v203
  %v217 = vadd.f32 %v185, %v208
  %v218 = vadd.f32 %v188, %v213
  %v219 = vtanh.pop %v215
  %v220 = vtanh.pop %v216
  %v221 = vtanh.pop %v217
  %v222 = vtanh.pop %v218
  %v223 = vld [vmem:[%s5] sm:$0xf]
  %v224 = vld [vmem:[%s5 + $0x4] sm:$0xf]
  %v225 = vld [vmem:[%s5 + $0x8] sm:$0xf]
  %v226 = vld [vmem:[%s5 + $0xc] sm:$0xf]
  %v227 = vpack.c.bf16 %v220, %v219
  %v228 = vpack.c.bf16 %v222, %v221
  %v229 = vld [vmem:[%s6] sm:$0xff]
  %v230 = vld [vmem:[%s6 + $0x8] sm:$0xff]
  %v231 = vld [vmem:[%s6 + $0x10] sm:$0xff]
  %v232 = vld [vmem:[%s6 + $0x18] sm:$0xff]
  %234 = vset.pattern.permute.xlu0 0
  %235 = vperm.xlu0 %234, %v229
  %v236 = vpop.permute.xlu0 %235
  %239 = vset.pattern.permute.xlu0 0
  %240 = vperm.xlu0 %239, %v230
  %v241 = vpop.permute.xlu0 %240
  %244 = vset.pattern.permute.xlu0 0
  %245 = vperm.xlu0 %244, %v231
  %v246 = vpop.permute.xlu0 %245
  %249 = vset.pattern.permute.xlu0 0
  %250 = vperm.xlu0 %249, %v232
  %v251 = vpop.permute.xlu0 %250
  %v257 = vunpack.c.l.b16 %v223
  %v258 = vunpack.c.l.b16 %v224
  %v259 = vunpack.c.l.b16 %v225
  %v260 = vunpack.c.l.b16 %v226
  %v261 = vpack.c.b16 %v258, %v257
  %v262 = vpack.c.b16 %v260, %v259
  %vm263 = vcmask 261120
  %v265 = vsel %vm263, %v261, 0
  %v268 = vsel %vm263, %v262, 0
  %270 = vmatprep.subr.bf16.mxu0 0
  %271 = vmatpush1.bf16.msra.mxu0 0
  %272 = vmatprep.subr.bf16.mxu0 0
  %273 = vmatpush1.bf16.msra.mxu0 0
  %274 = vmatprep.subr.bf16.mxu0 0
  %275 = vmatpush1.bf16.msra.mxu0 0
  %276 = vmatprep.subr.bf16.mxu0 0
  %277 = vmatpush1.bf16.msra.mxu0 0
  %278 = vmatprep.subr.bf16.mxu0 0
  %279 = vmatpush1.bf16.msra.mxu0 0
  %280 = vmatprep.subr.bf16.mxu0 0
  %281 = vmatpush1.bf16.msra.mxu0 0
  %282 = vmatprep.subr.bf16.mxu0 0
  %283 = vmatpush1.bf16.msra.mxu0 %v228
  %284 = vmatprep.subr.bf16.mxu0 0
  %285 = vmatpush1.bf16.msra.mxu0 %v227
  %286 = vmatprep.subr.bf16.mxu0 0
  %287 = vmatpush2.bf16.msra.mxu0 0
  %288 = vmatprep.subr.bf16.mxu0 0
  %289 = vmatpush2.bf16.msra.mxu0 0
  %290 = vmatprep.subr.bf16.mxu0 0
  %291 = vmatpush2.bf16.msra.mxu0 0
  %292 = vmatprep.subr.bf16.mxu0 0
  %293 = vmatpush2.bf16.msra.mxu0 0
  %294 = vmatprep.subr.bf16.mxu0 0
  %295 = vmatpush2.bf16.msra.mxu0 0
  %296 = vmatprep.subr.bf16.mxu0 0
  %297 = vmatpush2.bf16.msra.mxu0 0
  %298 = vmatprep.subr.bf16.mxu0 0
  %299 = vmatpush2.bf16.msra.mxu0 0
  %300 = vmatprep.subr.bf16.mxu0 0
  %301 = vmatpush2.bf16.msra.mxu0 0
  %302 = vmatprep.mubr.bf16.mxu0 0
  %303 = vmatmul.mubr.bf16.gmra.mxu0 %v265
  %v304 = vpop.f32.mrf.mxu0
  %v305 = vadd.f32 %v236, %v304
  %v306 = vpop.f32.mrf.mxu0
  %v307 = vpop.f32.mrf.mxu0
  %v308 = vadd.f32 %v241, %v307
  %v309 = vpop.f32.mrf.mxu0
  %310 = vmatprep.mubr.bf16.mxu0 0
  %311 = vmatmul.mubr.bf16.gmra.mxu0 %v268
  %v312 = vpop.f32.mrf.mxu0
  %v313 = vadd.f32 %v246, %v312
  %v314 = vpop.f32.mrf.mxu0
  %v315 = vpop.f32.mrf.mxu0
  %v316 = vadd.f32 %v251, %v315
  %v317 = vpop.f32.mrf.mxu0
  %318 = vdwg.mxu0
  %v319 = vtanh.pop %v305
  %v320 = vtanh.pop %v308
  %v321 = vtanh.pop %v313
  %v322 = vtanh.pop %v316
  %v323 = vld [vmem:[%s7] sm:$0xf]
  %v324 = vld [vmem:[%s7 + $0x4] sm:$0xf]
  %v325 = vpack.c.bf16 %v320, %v319
  %v326 = vpack.c.bf16 %v322, %v321
  %v327 = vld [vmem:[%s8] sm:$0xff]
  %v328 = vld [vmem:[%s8 + $0x8] sm:$0xff]
  %330 = vset.pattern.permute.xlu0 0
  %331 = vperm.xlu0 %330, %v327
  %v332 = vpop.permute.xlu0 %331
  %335 = vset.pattern.permute.xlu0 0
  %336 = vperm.xlu0 %335, %v328
  %v337 = vpop.permute.xlu0 %336
  %v341 = vunpack.c.l.b16 %v323
  %v342 = vunpack.c.l.b16 %v324
  %v343 = vpack.c.b16 %v342, %v341
  %v345 = vsel %vm263, %v343, 0
  %347 = vmatprep.subr.bf16.mxu0 0
  %348 = vmatpush1.bf16.msra.mxu0 0
  %349 = vmatprep.subr.bf16.mxu0 0
  %350 = vmatpush1.bf16.msra.mxu0 0
  %351 = vmatprep.subr.bf16.mxu0 0
  %352 = vmatpush1.bf16.msra.mxu0 0
  %353 = vmatprep.subr.bf16.mxu0 0
  %354 = vmatpush1.bf16.msra.mxu0 0
  %355 = vmatprep.subr.bf16.mxu0 0
  %356 = vmatpush1.bf16.msra.mxu0 0
  %357 = vmatprep.subr.bf16.mxu0 0
  %358 = vmatpush1.bf16.msra.mxu0 0
  %359 = vmatprep.subr.bf16.mxu0 0
  %360 = vmatpush1.bf16.msra.mxu0 %v326
  %361 = vmatprep.subr.bf16.mxu0 0
  %362 = vmatpush1.bf16.msra.mxu0 %v325
  %363 = vmatprep.subr.bf16.mxu0 0
  %364 = vmatpush2.bf16.msra.mxu0 0
  %365 = vmatprep.subr.bf16.mxu0 0
  %366 = vmatpush2.bf16.msra.mxu0 0
  %367 = vmatprep.subr.bf16.mxu0 0
  %368 = vmatpush2.bf16.msra.mxu0 0
  %369 = vmatprep.subr.bf16.mxu0 0
  %370 = vmatpush2.bf16.msra.mxu0 0
  %371 = vmatprep.subr.bf16.mxu0 0
  %372 = vmatpush2.bf16.msra.mxu0 0
  %373 = vmatprep.subr.bf16.mxu0 0
  %374 = vmatpush2.bf16.msra.mxu0 0
  %375 = vmatprep.subr.bf16.mxu0 0
  %376 = vmatpush2.bf16.msra.mxu0 0
  %377 = vmatprep.subr.bf16.mxu0 0
  %378 = vmatpush2.bf16.msra.mxu0 0
  %379 = vmatprep.mubr.bf16.mxu0 0
  %380 = vmatmul.mubr.bf16.gmra.mxu0 %v345
  %v381 = vpop.f32.mrf.mxu0
  %v382 = vadd.f32 %v332, %v381
  %v383 = vpop.f32.mrf.mxu0
  %v384 = vpop.f32.mrf.mxu0
  %v385 = vadd.f32 %v337, %v384
  %v386 = vpop.f32.mrf.mxu0
  %387 = vdwg.mxu0
  %vm388 = vcmask 64512
  %389 = vst.msk [vmem:[%s9] sm:$0xff] %vm388, %v382
  %390 = vst.msk [vmem:[%s9 + $0x8] sm:$0xff] %vm388, %v385
  // Predicated region
  $region38: #{tpu_custom_call.1} parent=0 // pred_check
    _
  $region39: #{tpu_custom_call.1} parent=0 // pred_check_branch
    %392 = sbr.rel (0) target = $region41
  $region40: #{tpu_custom_call.1} parent=0 // pred_region
    _
  $region41: #{tpu_custom_call.1} parent=0 // pred_fallthru
    _
  // Predicated region
  $region42: #{tpu_custom_call.1} parent=0 // pred_check
    _
  $region43: #{tpu_custom_call.1} parent=0 // pred_check_branch
    %394 = sbr.rel (0) target = $region45
  $region44: #{tpu_custom_call.1} parent=0 // pred_region
    _
  $region45: #{tpu_custom_call.1} parent=0 // pred_fallthru
    _

</llo_original>
